<compile_context>
chip_gen: v6e
topology: v6e:2x2x1
jax: 0.10.0
libtpu: 0.0.40
codegen_flags: <defaults>
</compile_context>

<pallas_src>
import functools

import jax
import jax.numpy as jnp
from jax.experimental import pallas as pl
from jax.experimental.pallas import tpu as pltpu


def _round_up(x, m):
    return (x + m - 1) // m * m


def _vmem_cap_bytes():
    """Physical per-core VMEM (trace-time query, conservative fallback)."""
    try:
        return int(pltpu.get_tpu_info().vmem_capacity_bytes)
    except Exception:
        return 64 * 1024 * 1024  # v7x per-TensorCore VMEM (smallest current gen)


def _vmem_limit(tile_bytes):
    """Scoped-VMEM limit derived from the actual per-step tiles (+ headroom)."""
    cap = _vmem_cap_bytes()
    want = int(tile_bytes) * 3 // 2 + (4 << 20)
    return int(min(max(want, 16 << 20), cap - (4 << 20)))


# ----------------------------------------------------------------------------
# Kernels
# ----------------------------------------------------------------------------
def mlp_trunk_kernel(x_ref, w1_ref, b1_ref, w2_ref, b2_ref, w3_ref, b3_ref, emb_ref):
    """Phase 1: emb = Linear3(ReLU(Linear2(ReLU(Linear1(x))))) for one batch tile.

    x_ref : (TB, 2E) bf16     w1_ref: (2E, 4E) bf16   b1_ref: (1, 4E) f32
    w2_ref: (4E, 4E) bf16     b2_ref: (1, 4E)  f32
    w3_ref: (4E, Ep) bf16     b3_ref: (1, Ep)  f32    emb_ref: (TB, Ep) bf16
    """
    h1 = jnp.dot(x_ref[...], w1_ref[...], preferred_element_type=jnp.float32) + b1_ref[...]
    h1 = jnp.maximum(h1, 0.0).astype(jnp.bfloat16)
    # Dropout is identity at inference.
    # TODO(synk): training-mode dropout (pltpu.prng_random_bits mask) not emitted.
    h2 = jnp.dot(h1, w2_ref[...], preferred_element_type=jnp.float32) + b2_ref[...]
    h2 = jnp.maximum(h2, 0.0).astype(jnp.bfloat16)
    emb = jnp.dot(h2, w3_ref[...], preferred_element_type=jnp.float32) + b3_ref[...]
    emb_ref[...] = emb.astype(emb_ref.dtype)


def score_kernel(emb_ref, lut_ref, o_ref):
    """Phase 2: one (item_tile, batch_tile) block of emb @ lut.T.

    emb_ref: (TB, Ep) bf16   lut_ref: (Ep, TN) bf16   o_ref: (TB, TN) out_dtype
    """
    o_ref[...] = jnp.dot(
        emb_ref[...], lut_ref[...], preferred_element_type=jnp.float32
    ).astype(o_ref.dtype)


# ----------------------------------------------------------------------------
# Wrapper
# ----------------------------------------------------------------------------
def prepare_params(w1, b1, w2, b2, w3, b3, lut):
    """One-time (cacheable) packing of the frozen parameters.

    Casts MXU operands to bf16, pads the output-embedding dim E to a lane
    multiple (128), pads the item dim to a multiple of 128 and pre-transposes
    the frozen lookup to (E_pad, N_pad).  Pad-after-cast: one cheap pass per
    array, no full-size zeros + scatter.
    """
    d_out = w3.shape[1]
    num_items = lut.shape[0]
    e_pad = _round_up(d_out, 128)
    n_pad = _round_up(num_items, 128)
    bf = jnp.bfloat16
    w1_b = jnp.asarray(w1, bf)
    w2_b = jnp.asarray(w2, bf)
    w3_b = jnp.pad(jnp.asarray(w3, bf), ((0, 0), (0, e_pad - d_out)))
    b3_p = jnp.pad(jnp.asarray(b3, jnp.float32), ((0, 0), (0, e_pad - d_out)))
    lutT_b = jnp.pad(jnp.asarray(lut, bf).T,
                     ((0, e_pad - d_out), (0, n_pad - num_items)))
    return (w1_b, jnp.asarray(b1, jnp.float32), w2_b, jnp.asarray(b2, jnp.float32),
            w3_b, b3_p, lutT_b)


@functools.partial(jax.jit, static_argnames=("num_items", "tb", "tn", "out_dtype"))
def inverse_dynamics(x, w1_b, b1, w2_b, b2, w3_b, b3_p, lutT_b, *,
                     num_items, tb=None, tn=None, out_dtype=jnp.float32):
    """scores = mlp(x) @ lookup.T, using the packed params from prepare_params."""
    B, d_in = x.shape
    d_hid = w1_b.shape[1]
    e_pad = w3_b.shape[1]
    n_pad128 = lutT_b.shape[1]  # num_items already rounded up to 128

    # ---- item tile: lane-dense (multiple of 128); single tile when it fits,
    # ---- otherwise prefer an exact divisor of the 128-padded item count.
    if tn is None:
        if n_pad128 <= 2048:
            tn = n_pad128
        else:
            tn = next((t for t in (2048, 1536, 1024, 768, 512) if n_pad128 % t == 0),
                      1024)  # fallback wastes < tn columns of padding for awkward N
    assert tn % 128 == 0, "tn must be a multiple of 128"
    n_pad = _round_up(n_pad128, tn)

    # ---- batch tile: small batches round to 16 (bf16 sublane pack), large to 128.
    if tb is None:
        tb = _round_up(B, 16) if B < 128 else min(512, _round_up(B, 128))
    assert tb % 16 == 0, "tb must be a multiple of 16"
    b_pad = _round_up(B, tb)

    x_p = jnp.pad(x.astype(jnp.bfloat16), ((0, b_pad - B), (0, 0)))
    lut_p = (lutT_b if n_pad == n_pad128
             else jnp.pad(lutT_b, ((0, 0), (0, n_pad - n_pad128))))

    # ------------------------- phase 1: MLP trunk ---------------------------
    trunk_bytes = 2 * (                      # Pallas double-buffers every operand
        tb * d_in * 2
        + d_in * d_hid * 2 + d_hid * 4
        + d_hid * d_hid * 2 + d_hid * 4
        + d_hid * e_pad * 2 + e_pad * 4
        + tb * e_pad * 2
    ) + 2 * tb * d_hid * 4                   # h1 / h2 f32 temporaries

    emb = pl.pallas_call(
        mlp_trunk_kernel,
        out_shape=jax.ShapeDtypeStruct((b_pad, e_pad), jnp.bfloat16),
        grid_spec=pltpu.PrefetchScalarGridSpec(
            num_scalar_prefetch=0,
            grid=(b_pad // tb,),
            in_specs=[
                pl.BlockSpec((tb, d_in), lambda i: (i, 0)),        # x tile
                # Resident weights (constant block index).  For very large emb_dim
                # on a 64 MiB part, pipeline_mode=pl.Buffered(1) here would halve
                # their VMEM footprint.
                pl.BlockSpec((d_in, d_hid), lambda i: (0, 0)),     # w1
                pl.BlockSpec((1, d_hid), lambda i: (0, 0)),        # b1
                pl.BlockSpec((d_hid, d_hid), lambda i: (0, 0)),    # w2
                pl.BlockSpec((1, d_hid), lambda i: (0, 0)),        # b2
                pl.BlockSpec((d_hid, e_pad), lambda i: (0, 0)),    # w3 (E padded)
                pl.BlockSpec((1, e_pad), lambda i: (0, 0)),        # b3 (E padded)
            ],
            out_specs=pl.BlockSpec((tb, e_pad), lambda i: (i, 0)),
        ),
        compiler_params=pltpu.CompilerParams(
            dimension_semantics=("parallel",),
            vmem_limit_bytes=_vmem_limit(trunk_bytes),
        ),
    )(x_p, w1_b, b1, w2_b, b2, w3_b, b3_p)

    # ------------------------- phase 2: scoring -----------------------------
    out_itemsize = jnp.dtype(out_dtype).itemsize
    score_bytes = (2 * (tb * e_pad * 2 + e_pad * tn * 2 + tb * tn * out_itemsize)
                   + tb * tn * 4)

    out = pl.pallas_call(
        score_kernel,
        out_shape=jax.ShapeDtypeStruct((b_pad, n_pad), out_dtype),
        grid_spec=pltpu.PrefetchScalarGridSpec(
            num_scalar_prefetch=0,
            # items OUTER, batch inner: each (Ep, tn) lookup tile is DMAed exactly
            # once; only the small (tb, Ep) emb tile is re-read across item tiles.
            grid=(n_pad // tn, b_pad // tb),
            in_specs=[
                pl.BlockSpec((tb, e_pad), lambda j, i: (i, 0)),    # emb tile
                pl.BlockSpec((e_pad, tn), lambda j, i: (0, j)),    # lut.T tile
                # (v5e: pipeline_mode=pl.Buffered(3) on the lut/out streams would
                #  hide more of the exposed DMA; omitted for compile safety.)
            ],
            out_specs=pl.BlockSpec((tb, tn), lambda j, i: (i, j)),
        ),
        compiler_params=pltpu.CompilerParams(
            dimension_semantics=("parallel", "parallel"),          # v7x megacore
            vmem_limit_bytes=_vmem_limit(score_bytes),
        ),
    )(emb, lut_p)

    return out[:B, :num_items]


# ----------------------------------------------------------------------------
# Parameters & references
# ----------------------------------------------------------------------------
def init_params(key, emb_dim, num_items):
    """Deterministic synthetic parameters.

    Weights stored as (in_features, out_features) so the kernels compute x @ W
    (equivalent to PyTorch's x @ weight.T).  Biases kept 2D (1, out).
    """
    k1, k2, k3, k4, k5, k6, k7 = jax.random.split(key, 7)
    d_in, d_hid, d_out = 2 * emb_dim, 4 * emb_dim, emb_dim
    scale = 0.05
    w1 = scale * jax.random.normal(k1, (d_in, d_hid), jnp.float32)
    b1 = 0.01 * jax.random.normal(k5, (1, d_hid), jnp.float32)
    w2 = scale * jax.random.normal(k2, (d_hid, d_hid), jnp.float32)
    b2 = 0.01 * jax.random.normal(k6, (1, d_hid), jnp.float32)
    w3 = scale * jax.random.normal(k3, (d_hid, d_out), jnp.float32)
    b3 = 0.01 * jax.random.normal(k7, (1, d_out), jnp.float32)
    lut = jax.random.normal(k4, (num_items, d_out), jnp.float32)   # frozen lookup
    return w1, b1, w2, b2, w3, b3, lut


def reference_exact(x, w1, b1, w2, b2, w3, b3, lut):
    """Pure-f32 reference with the original PyTorch semantics."""
    h1 = jnp.maximum(x @ w1 + b1, 0.0)
    h2 = jnp.maximum(h1 @ w2 + b2, 0.0)
    emb = h2 @ w3 + b3
    return emb @ lut.T


def reference_mirrored(x, w1, b1, w2, b2, w3, b3, lut):
    """Reference mirroring the kernel's bf16/f32 dtype pipeline exactly."""
    bf = jnp.bfloat16
    h1 = jnp.dot(x.astype(bf), w1.astype(bf), preferred_element_type=jnp.float32) + b1
    h1 = jnp.maximum(h1, 0.0).astype(bf)
    h2 = jnp.dot(h1, w2.astype(bf), preferred_element_type=jnp.float32) + b2
    h2 = jnp.maximum(h2, 0.0).astype(bf)
    emb = (jnp.dot(h2, w3.astype(bf), preferred_element_type=jnp.float32) + b3).astype(bf)
    return jnp.dot(emb, lut.T.astype(bf), preferred_element_type=jnp.float32)


if __name__ == "__main__":
    emb_dim = 32
    num_items = 200
    batch = 8

    key = jax.random.PRNGKey(0)
    kx, kp = jax.random.split(key)

    # x is the concatenation of two state embeddings -> (B, 2*emb_dim)
    x = jax.random.normal(kx, (batch, 2 * emb_dim), jnp.float32)
    params = init_params(kp, emb_dim, num_items)

    prepared = prepare_params(*params)           # one-time, cacheable packing
    out = inverse_dynamics(x, *prepared, num_items=num_items)
    out = jax.block_until_ready(out)
    assert out.shape == (batch, num_items), out.shape

    # Tight check against a reference with the same dtype pipeline.
    ref_m = reference_mirrored(x, *params)
    err_m = float(jnp.max(jnp.abs(out - ref_m)))
    assert jnp.allclose(out, ref_m, atol=2e-3, rtol=2e-3), err_m

    # Loose check against the exact f32 PyTorch-semantics reference (bf16 noise).
    ref_f = reference_exact(x, *params)
    err_f = float(jnp.max(jnp.abs(out - ref_f)))
    assert jnp.allclose(out, ref_f, atol=1e-1, rtol=1e-1), err_f

    print("KERNEL_OK")
</pallas_src>

<mosaic_0001>
module attributes {stable_mosaic.version = 11 : i64} {
  func.func @score_kernel(%arg0: i32, %arg1: i32, %arg2: memref<16x128xbf16, #tpu.memory_space<vmem>>, %arg3: memref<128x256xbf16, #tpu.memory_space<vmem>>, %arg4: memref<16x256xf32, #tpu.memory_space<vmem>>) attributes {dimension_semantics = [#tpu.dimension_semantics<parallel>, #tpu.dimension_semantics<parallel>], iteration_bounds = array<i64: 1, 1>, scalar_prefetch = 0 : i64, scratch_operands = 0 : i64, tpu.core_type = #tpu.core_type<tc>, window_params = [{transform_indices = @transform_0, window_bounds = array<i64: 16, 128>}, {transform_indices = @transform_1, window_bounds = array<i64: 128, 256>}, {transform_indices = @transform_2, window_bounds = array<i64: 16, 256>}]} {
    %c0 = arith.constant 0 : index
    %c0_0 = arith.constant 0 : index
    %0 = vector.load %arg2[%c0, %c0_0] : memref<16x128xbf16, #tpu.memory_space<vmem>>, vector<16x128xbf16>
    %c0_1 = arith.constant 0 : index
    %c0_2 = arith.constant 0 : index
    %1 = vector.load %arg3[%c0_1, %c0_2] : memref<128x256xbf16, #tpu.memory_space<vmem>>, vector<128x256xbf16>
    %cst = arith.constant dense<0.000000e+00> : vector<16x256xf32>
    %2 = tpu.matmul %0, %1, %cst {dimension_numbers = #tpu.dot_dimension_numbers<[1], [0], [0], [1], [0, 0, 1, 1], [], []>} : vector<16x128xbf16>, vector<128x256xbf16>, vector<16x256xf32> -> vector<16x256xf32>
    %c0_3 = arith.constant 0 : index
    %c0_4 = arith.constant 0 : index
    %3 = vector.load %arg4[%c0_3, %c0_4] : memref<16x256xf32, #tpu.memory_space<vmem>>, vector<16x256xf32>
    tpu.vector_store %arg4[%c0_3, %c0_4], %2 {strides = array<i32>} : memref<16x256xf32, #tpu.memory_space<vmem>>, vector<16x256xf32>,
    return
  }
  func.func @transform_0(%arg0: i32, %arg1: i32) -> (i32, i32) {
    %c0_i32 = arith.constant 0 : i32
    %c0_i32_0 = arith.constant 0 : i32
    return %arg1, %c0_i32 : i32, i32
  }
  func.func @transform_1(%arg0: i32, %arg1: i32) -> (i32, i32) {
    %c0_i32 = arith.constant 0 : i32
    %c0_i32_0 = arith.constant 0 : i32
    return %c0_i32, %arg0 : i32, i32
  }
  func.func @transform_2(%arg0: i32, %arg1: i32) -> (i32, i32) {
    %c0_i32 = arith.constant 0 : i32
    return %arg1, %arg0 : i32, i32
  }
}

module attributes {stable_mosaic.version = 11 : i64} {
  func.func @mlp_trunk_kernel(%arg0: i32, %arg1: memref<16x64xbf16, #tpu.memory_space<vmem>>, %arg2: memref<64x128xbf16, #tpu.memory_space<vmem>>, %arg3: memref<1x128xf32, #tpu.memory_space<vmem>>, %arg4: memref<128x128xbf16, #tpu.memory_space<vmem>>, %arg5: memref<1x128xf32, #tpu.memory_space<vmem>>, %arg6: memref<128x128xbf16, #tpu.memory_space<vmem>>, %arg7: memref<1x128xf32, #tpu.memory_space<vmem>>, %arg8: memref<16x128xbf16, #tpu.memory_space<vmem>>) attributes {dimension_semantics = [#tpu.dimension_semantics<parallel>], iteration_bounds = array<i64: 1>, scalar_prefetch = 0 : i64, scratch_operands = 0 : i64, tpu.core_type = #tpu.core_type<tc>, window_params = [{transform_indices = @transform_0, window_bounds = array<i64: 16, 64>}, {pipeline_mode = #tpu.pipeline_mode<synchronous>, transform_indices = @transform_1, window_bounds = array<i64: 64, 128>}, {pipeline_mode = #tpu.pipeline_mode<synchronous>, transform_indices = @transform_2, window_bounds = array<i64: 1, 128>}, {pipeline_mode = #tpu.pipeline_mode<synchronous>, transform_indices = @transform_3, window_bounds = array<i64: 128, 128>}, {pipeline_mode = #tpu.pipeline_mode<synchronous>, transform_indices = @transform_4, window_bounds = array<i64: 1, 128>}, {pipeline_mode = #tpu.pipeline_mode<synchronous>, transform_indices = @transform_5, window_bounds = array<i64: 128, 128>}, {pipeline_mode = #tpu.pipeline_mode<synchronous>, transform_indices = @transform_6, window_bounds = array<i64: 1, 128>}, {transform_indices = @transform_7, window_bounds = array<i64: 16, 128>}]} {
    %c0 = arith.constant 0 : index
    %c0_0 = arith.constant 0 : index
    %0 = vector.load %arg1[%c0, %c0_0] : memref<16x64xbf16, #tpu.memory_space<vmem>>, vector<16x64xbf16>
    %c0_1 = arith.constant 0 : index
    %c0_2 = arith.constant 0 : index
    %1 = vector.load %arg2[%c0_1, %c0_2] : memref<64x128xbf16, #tpu.memory_space<vmem>>, vector<64x128xbf16>
    %cst = arith.constant dense<0.000000e+00> : vector<16x128xf32>
    %2 = tpu.matmul %0, %1, %cst {dimension_numbers = #tpu.dot_dimension_numbers<[1], [0], [0], [1], [0, 0, 1, 1], [], []>} : vector<16x64xbf16>, vector<64x128xbf16>, vector<16x128xf32> -> vector<16x128xf32>
    %c0_3 = arith.constant 0 : index
    %c0_4 = arith.constant 0 : index
    %3 = vector.load %arg3[%c0_3, %c0_4] : memref<1x128xf32, #tpu.memory_space<vmem>>, vector<1x128xf32>
    %4 = vector.broadcast %3 : vector<1x128xf32> to vector<16x128xf32>
    %5 = arith.addf %2, %4 : vector<16x128xf32>
    %cst_5 = arith.constant 0.000000e+00 : f32
    %6 = vector.broadcast %cst_5 : f32 to vector<16x128xf32>
    %7 = arith.maximumf %5, %6 : vector<16x128xf32>
    %8 = arith.truncf %7 : vector<16x128xf32> to vector<16x128xbf16>
    %c0_6 = arith.constant 0 : index
    %c0_7 = arith.constant 0 : index
    %9 = vector.load %arg4[%c0_6, %c0_7] : memref<128x128xbf16, #tpu.memory_space<vmem>>, vector<128x128xbf16>
    %cst_8 = arith.constant dense<0.000000e+00> : vector<16x128xf32>
    %10 = tpu.matmul %8, %9, %cst_8 {dimension_numbers = #tpu.dot_dimension_numbers<[1], [0], [0], [1], [0, 0, 1, 1], [], []>} : vector<16x128xbf16>, vector<128x128xbf16>, vector<16x128xf32> -> vector<16x128xf32>
    %c0_9 = arith.constant 0 : index
    %c0_10 = arith.constant 0 : index
    %11 = vector.load %arg5[%c0_9, %c0_10] : memref<1x128xf32, #tpu.memory_space<vmem>>, vector<1x128xf32>
    %12 = vector.broadcast %11 : vector<1x128xf32> to vector<16x128xf32>
    %13 = arith.addf %10, %12 : vector<16x128xf32>
    %cst_11 = arith.constant 0.000000e+00 : f32
    %14 = vector.broadcast %cst_11 : f32 to vector<16x128xf32>
    %15 = arith.maximumf %13, %14 : vector<16x128xf32>
    %16 = arith.truncf %15 : vector<16x128xf32> to vector<16x128xbf16>
    %c0_12 = arith.constant 0 : index
    %c0_13 = arith.constant 0 : index
    %17 = vector.load %arg6[%c0_12, %c0_13] : memref<128x128xbf16, #tpu.memory_space<vmem>>, vector<128x128xbf16>
    %cst_14 = arith.constant dense<0.000000e+00> : vector<16x128xf32>
    %18 = tpu.matmul %16, %17, %cst_14 {dimension_numbers = #tpu.dot_dimension_numbers<[1], [0], [0], [1], [0, 0, 1, 1], [], []>} : vector<16x128xbf16>, vector<128x128xbf16>, vector<16x128xf32> -> vector<16x128xf32>
    %c0_15 = arith.constant 0 : index
    %c0_16 = arith.constant 0 : index
    %19 = vector.load %arg7[%c0_15, %c0_16] : memref<1x128xf32, #tpu.memory_space<vmem>>, vector<1x128xf32>
    %20 = vector.broadcast %19 : vector<1x128xf32> to vector<16x128xf32>
    %21 = arith.addf %18, %20 : vector<16x128xf32>
    %22 = arith.truncf %21 : vector<16x128xf32> to vector<16x128xbf16>
    %c0_17 = arith.constant 0 : index
    %c0_18 = arith.constant 0 : index
    %23 = vector.load %arg8[%c0_17, %c0_18] : memref<16x128xbf16, #tpu.memory_space<vmem>>, vector<16x128xbf16>
    tpu.vector_store %arg8[%c0_17, %c0_18], %22 {strides = array<i32>} : memref<16x128xbf16, #tpu.memory_space<vmem>>, vector<16x128xbf16>,
    return
  }
  func.func @transform_0(%arg0: i32) -> (i32, i32) {
    %c0_i32 = arith.constant 0 : i32
    %c0_i32_0 = arith.constant 0 : i32
    return %arg0, %c0_i32 : i32, i32
  }
  func.func @transform_1(%arg0: i32) -> (i32, i32) {
    %c0_i32 = arith.constant 0 : i32
    %c0_i32_0 = arith.constant 0 : i32
    %c0_i32_1 = arith.constant 0 : i32
    return %c0_i32, %c0_i32_0 : i32, i32
  }
  func.func @transform_2(%arg0: i32) -> (i32, i32) {
    %c0_i32 = arith.constant 0 : i32
    %c0_i32_0 = arith.constant 0 : i32
    %c0_i32_1 = arith.constant 0 : i32
    return %c0_i32, %c0_i32_0 : i32, i32
  }
  func.func @transform_3(%arg0: i32) -> (i32, i32) {
    %c0_i32 = arith.constant 0 : i32
    %c0_i32_0 = arith.constant 0 : i32
    %c0_i32_1 = arith.constant 0 : i32
    return %c0_i32, %c0_i32_0 : i32, i32
  }
  func.func @transform_4(%arg0: i32) -> (i32, i32) {
    %c0_i32 = arith.constant 0 : i32
    %c0_i32_0 = arith.constant 0 : i32
    %c0_i32_1 = arith.constant 0 : i32
    return %c0_i32, %c0_i32_0 : i32, i32
  }
  func.func @transform_5(%arg0: i32) -> (i32, i32) {
    %c0_i32 = arith.constant 0 : i32
    %c0_i32_0 = arith.constant 0 : i32
    %c0_i32_1 = arith.constant 0 : i32
    return %c0_i32, %c0_i32_0 : i32, i32
  }
  func.func @transform_6(%arg0: i32) -> (i32, i32) {
    %c0_i32 = arith.constant 0 : i32
    %c0_i32_0 = arith.constant 0 : i32
    %c0_i32_1 = arith.constant 0 : i32
    return %c0_i32, %c0_i32_0 : i32, i32
  }
  func.func @transform_7(%arg0: i32) -> (i32, i32) {
    %c0_i32 = arith.constant 0 : i32
    %c0_i32_0 = arith.constant 0 : i32
    return %arg0, %c0_i32 : i32, i32
  }
}

</mosaic_0001>

<llo_original>
// kernel: inverse_dynamics.3
$region0: #{inverse_dynamics.3}
  #allocation0 [shape = 'u32[]', space=smem, size = 0x4, offset = 0x4, fixed_abs, tag = 'smem constant byte address 0x4 - core index']
  #allocation1 [shape = 'u32[144,128]{1,0:T(1,128)}', space=vmem, size = 0x12000, scoped, tag = 'internal scratch']
  %s0 = inlined_call_operand.vmem [shape: bf16[16,128], index: 0, kind: input, shape index: {}]
  %s1 = inlined_call_operand.vmem [shape: bf16[128,256], index: 1, kind: input, shape index: {}]
  %s2 = inlined_call_operand.vmem [shape: f32[16,256], index: 2, kind: output, shape index: {}]
  %s3 = sld [smem:[#allocation0]]
  $region18: #{inverse_dynamics.3} parent=0
    _
  %s5 = ssub.s32 1, %s3
  %s6 = scalar_select 0, %s5, %s3
  // Predicated region
  $region2: #{inverse_dynamics.3} parent=0 // pred_check
    _
  $region3: #{inverse_dynamics.3} parent=0 // pred_check_branch
    %8 = sbr.rel (0) target = $region5
  $region4: #{inverse_dynamics.3} parent=0 // pred_region
    _
  $region5: #{inverse_dynamics.3} parent=0 // pred_fallthru
    _
  // Predicated region
  $region6: #{inverse_dynamics.3} parent=0 // pred_check
    _
  $region7: #{inverse_dynamics.3} parent=0 // pred_check_branch
    %10 = sbr.rel (0) target = $region9
  $region8: #{inverse_dynamics.3} parent=0 // pred_region
    _
  $region9: #{inverse_dynamics.3} parent=0 // pred_fallthru
    _
  %v12 = vld [vmem:[%s0] sm:$0xf]
  %v13 = vld [vmem:[%s0 + $0x4] sm:$0xf]
  %v14 = vld [vmem:[%s1] sm:$0xff]
  %v15 = vld [vmem:[%s1 + $0x8] sm:$0xff]
  %v16 = vld [vmem:[%s1 + $0x10] sm:$0xff]
  %v17 = vld [vmem:[%s1 + $0x18] sm:$0xff]
  %v18 = vld [vmem:[%s1 + $0x20] sm:$0xff]
  %v19 = vld [vmem:[%s1 + $0x28] sm:$0xff]
  %v20 = vld [vmem:[%s1 + $0x30] sm:$0xff]
  %v21 = vld [vmem:[%s1 + $0x38] sm:$0xff]
  %v22 = vld [vmem:[%s1 + $0x40] sm:$0xff]
  %v23 = vld [vmem:[%s1 + $0x48] sm:$0xff]
  %v24 = vld [vmem:[%s1 + $0x50] sm:$0xff]
  %v25 = vld [vmem:[%s1 + $0x58] sm:$0xff]
  %v26 = vld [vmem:[%s1 + $0x60] sm:$0xff]
  %v27 = vld [vmem:[%s1 + $0x68] sm:$0xff]
  %v28 = vld [vmem:[%s1 + $0x70] sm:$0xff]
  %v29 = vld [vmem:[%s1 + $0x78] sm:$0xff]
  %v32 = vunpack.c.l.b16 %v12
  %v33 = vunpack.c.l.b16 %v13
  %v34 = vpack.c.b16 %v33, %v32
  %v52 = vunpack.c.l.b16 %v14
  %v53 = vunpack.c.h.b16 %v14
  %v54 = vunpack.c.l.b16 %v15
  %v55 = vunpack.c.h.b16 %v15
  %v56 = vunpack.c.l.b16 %v16
  %v57 = vunpack.c.h.b16 %v16
  %v58 = vunpack.c.l.b16 %v17
  %v59 = vunpack.c.h.b16 %v17
  %v60 = vunpack.c.l.b16 %v18
  %v61 = vunpack.c.h.b16 %v18
  %v62 = vunpack.c.l.b16 %v19
  %v63 = vunpack.c.h.b16 %v19
  %v64 = vunpack.c.l.b16 %v20
  %v65 = vunpack.c.h.b16 %v20
  %v66 = vunpack.c.l.b16 %v21
  %v67 = vunpack.c.h.b16 %v21
  %v68 = vunpack.c.l.b16 %v22
  %v69 = vunpack.c.h.b16 %v22
  %v70 = vunpack.c.l.b16 %v23
  %v71 = vunpack.c.h.b16 %v23
  %v72 = vunpack.c.l.b16 %v24
  %v73 = vunpack.c.h.b16 %v24
  %v74 = vunpack.c.l.b16 %v25
  %v75 = vunpack.c.h.b16 %v25
  %v76 = vunpack.c.l.b16 %v26
  %v77 = vunpack.c.h.b16 %v26
  %v78 = vunpack.c.l.b16 %v27
  %v79 = vunpack.c.h.b16 %v27
  %v80 = vunpack.c.l.b16 %v28
  %v81 = vunpack.c.h.b16 %v28
  %v82 = vunpack.c.l.b16 %v29
  %v83 = vunpack.c.h.b16 %v29
  %v84 = vpack.c.b16 %v54, %v52
  %v85 = vpack.c.b16 %v55, %v53
  %v86 = vpack.c.b16 %v58, %v56
  %v87 = vpack.c.b16 %v59, %v57
  %v88 = vpack.c.b16 %v62, %v60
  %v89 = vpack.c.b16 %v63, %v61
  %v90 = vpack.c.b16 %v66, %v64
  %v91 = vpack.c.b16 %v67, %v65
  %v92 = vpack.c.b16 %v70, %v68
  %v93 = vpack.c.b16 %v71, %v69
  %v94 = vpack.c.b16 %v74, %v72
  %v95 = vpack.c.b16 %v75, %v73
  %v96 = vpack.c.b16 %v78, %v76
  %v97 = vpack.c.b16 %v79, %v77
  %v98 = vpack.c.b16 %v82, %v80
  %v99 = vpack.c.b16 %v83, %v81
  %116 = vmatprep.subr.bf16.mxu0 %v99
  %117 = vmatpush1.bf16.msra.mxu0 %v98
  %118 = vmatprep.subr.bf16.mxu0 %v97
  %119 = vmatpush1.bf16.msra.mxu0 %v96
  %120 = vmatprep.subr.bf16.mxu0 %v95
  %121 = vmatpush1.bf16.msra.mxu0 %v94
  %122 = vmatprep.subr.bf16.mxu0 %v93
  %123 = vmatpush1.bf16.msra.mxu0 %v92
  %124 = vmatprep.subr.bf16.mxu0 %v91
  %125 = vmatpush1.bf16.msra.mxu0 %v90
  %126 = vmatprep.subr.bf16.mxu0 %v89
  %127 = vmatpush1.bf16.msra.mxu0 %v88
  %128 = vmatprep.subr.bf16.mxu0 %v87
  %129 = vmatpush1.bf16.msra.mxu0 %v86
  %130 = vmatprep.subr.bf16.mxu0 %v85
  %131 = vmatpush1.bf16.msra.mxu0 %v84
  %132 = vmatprep.subr.bf16.mxu0 0
  %133 = vmatpush2.bf16.msra.mxu0 0
  %134 = vmatprep.subr.bf16.mxu0 0
  %135 = vmatpush2.bf16.msra.mxu0 0
  %136 = vmatprep.subr.bf16.mxu0 0
  %137 = vmatpush2.bf16.msra.mxu0 0
  %138 = vmatprep.subr.bf16.mxu0 0
  %139 = vmatpush2.bf16.msra.mxu0 0
  %140 = vmatprep.subr.bf16.mxu0 0
  %141 = vmatpush2.bf16.msra.mxu0 0
  %142 = vmatprep.subr.bf16.mxu0 0
  %143 = vmatpush2.bf16.msra.mxu0 0
  %144 = vmatprep.subr.bf16.mxu0 0
  %145 = vmatpush2.bf16.msra.mxu0 0
  %146 = vmatprep.subr.bf16.mxu0 0
  %147 = vmatpush2.bf16.msra.mxu0 0
  %148 = vmatprep.mubr.bf16.mxu0 0
  %149 = vmatmul.mubr.bf16.gmra.mxu0 %v34
  %v150 = vpop.f32.mrf.mxu0
  %v151 = vadd.f32 0.0, %v150
  %v152 = vpop.f32.mrf.mxu0
  %v153 = vadd.f32 0.0, %v152
  %v154 = vpop.f32.mrf.mxu0
  %v155 = vadd.f32 0.0, %v154
  %v156 = vpop.f32.mrf.mxu0
  %v157 = vadd.f32 0.0, %v156
  %158 = vdwg.mxu0
  %159 = vst [vmem:[%s2] sm:$0xff] %v151
  %160 = vst [vmem:[%s2 + $0x8] sm:$0xff] %v153
  %161 = vst [vmem:[%s2 + $0x10] sm:$0xff] %v155
  %162 = vst [vmem:[%s2 + $0x18] sm:$0xff] %v157
  // Predicated region
  $region10: #{inverse_dynamics.3} parent=0 // pred_check
    _
  $region11: #{inverse_dynamics.3} parent=0 // pred_check_branch
    %164 = sbr.rel (0) target = $region13
  $region12: #{inverse_dynamics.3} parent=0 // pred_region
    _
  $region13: #{inverse_dynamics.3} parent=0 // pred_fallthru
    _
  // Predicated region
  $region14: #{inverse_dynamics.3} parent=0 // pred_check
    _
  $region15: #{inverse_dynamics.3} parent=0 // pred_check_branch
    %166 = sbr.rel (0) target = $region17
  $region16: #{inverse_dynamics.3} parent=0 // pred_region
    _
  $region17: #{inverse_dynamics.3} parent=0 // pred_fallthru
    _

// kernel: inverse_dynamics.2
$region0: #{inverse_dynamics.2}
  #allocation0 [shape = 'u32[]', space=smem, size = 0x4, offset = 0x4, fixed_abs, tag = 'smem constant byte address 0x4 - core index']
  #allocation1 [shape = 'u32[144,128]{1,0:T(1,128)}', space=vmem, size = 0x12000, scoped, tag = 'internal scratch']
  %s0 = inlined_call_operand.vmem [shape: bf16[16,64], index: 0, kind: input, shape index: {}]
  %s1 = inlined_call_operand.hbm [shape: bf16[64,128], index: 1, kind: input, shape index: {}]
  %s2 = inlined_call_operand.hbm [shape: f32[1,128], index: 2, kind: input, shape index: {}]
  %s3 = inlined_call_operand.hbm [shape: bf16[128,128], index: 3, kind: input, shape index: {}]
  %s4 = inlined_call_operand.hbm [shape: f32[1,128], index: 4, kind: input, shape index: {}]
  %s5 = inlined_call_operand.hbm [shape: bf16[128,128], index: 5, kind: input, shape index: {}]
  %s6 = inlined_call_operand.hbm [shape: f32[1,128], index: 6, kind: input, shape index: {}]
  %s7 = inlined_call_operand.vmem [shape: bf16[16,128], index: 7, kind: output, shape index: {}]
  %s8 = sld [smem:[#allocation0]]
  $region62: #{inverse_dynamics.2} parent=0
    _
  %s10 = ssub.s32 1, %s8
  %s11 = scalar_select 0, %s10, %s8
  $region1: #{inverse_dynamics.2} parent=0
    #allocation2 [shape = 'u8[16384]{0}', space=vmem, size = 0x4000, scoped, tag = 'input window, operand 1, single buffered']
    #allocation3 [shape = 's32[1]{0}', space=sflag, size = 0x4, scoped, tag = 'scoped memory for inverse_dynamics.2']
    #allocation4 [shape = 'u8[512]{0}', space=vmem, size = 0x400, scoped, tag = 'input window, operand 2, single buffered']
    #allocation5 [shape = 's32[1]{0}', space=sflag, size = 0x4, scoped, tag = 'scoped memory for inverse_dynamics.2']
    #allocation6 [shape = 'u8[32768]{0}', space=vmem, size = 0x8000, scoped, tag = 'input window, operand 3, single buffered']
    #allocation7 [shape = 'u8[512]{0}', space=vmem, size = 0x400, scoped, tag = 'input window, operand 4, single buffered']
    #allocation8 [shape = 's32[1]{0}', space=sflag, size = 0x4, scoped, tag = 'scoped memory for inverse_dynamics.2']
    #allocation9 [shape = 'u8[32768]{0}', space=vmem, size = 0x8000, scoped, tag = 'input window, operand 5, single buffered']
    #allocation10 [shape = 'u8[512]{0}', space=vmem, size = 0x400, scoped, tag = 'input window, operand 6, single buffered']
    #allocation11 [shape = 's32[1]{0}', space=sflag, size = 0x4, scoped, tag = 'scoped memory for inverse_dynamics.2']
    %12 = vsyncpa [#allocation3], 0
    %13 = vsyncpa [#allocation5], 0
    %14 = vsyncpa [#allocation8], 0
    %15 = vsyncpa [#allocation11], 0
    // Predicated region
    $region2: #{inverse_dynamics.2} parent=1 // pred_check
      _
    $region3: #{inverse_dynamics.2} parent=1 // pred_check_branch
      %17 = sbr.rel (0) target = $region5
    $region4: #{inverse_dynamics.2} parent=1 // pred_region
      _
    $region5: #{inverse_dynamics.2} parent=1 // pred_fallthru
      _
    // Predicated region
    $region6: #{inverse_dynamics.2} parent=1 // pred_check
      _
    $region7: #{inverse_dynamics.2} parent=1 // pred_check_branch
      %19 = sbr.rel (0) target = $region9
    $region8: #{inverse_dynamics.2} parent=1 // pred_region
      %s21 = ssub.s32 512, 512
      %22 = vsyncadd [#allocation3], %s21
      %s23 = sshll.u32 [#allocation2], 4
      %s24 = int_to_ptr.vmem [resolvable:$true] %s23
      %29 = dma.hbm_to_vmem [thread:$0]  %s1, 512, %s24, [#allocation3], 64, 64, 4
    $region9: #{inverse_dynamics.2} parent=1 // pred_fallthru
      _
    // Predicated region
    $region10: #{inverse_dynamics.2} parent=1 // pred_check
      _
    $region11: #{inverse_dynamics.2} parent=1 // pred_check_branch
      %31 = sbr.rel (0) target = $region13
    $region12: #{inverse_dynamics.2} parent=1 // pred_region
      %s33 = ssub.s32 16, 16
      %34 = vsyncadd [#allocation5], %s33
      %s36 = sshll.u32 [#allocation4], 4
      %s37 = int_to_ptr.vmem [resolvable:$true] %s36
      %39 = dma.hbm_to_vmem [thread:$0]  %s2, 16, %s37, [#allocation5]
    $region13: #{inverse_dynamics.2} parent=1 // pred_fallthru
      _
    // Predicated region
    $region14: #{inverse_dynamics.2} parent=1 // pred_check
      _
    $region15: #{inverse_dynamics.2} parent=1 // pred_check_branch
      %41 = sbr.rel (0) target = $region17
    $region16: #{inverse_dynamics.2} parent=1 // pred_region
      %s43 = ssub.s32 1024, 1024
      %44 = vsyncadd [#allocation5], %s43
      %s45 = sshll.u32 [#allocation6], 4
      %s46 = int_to_ptr.vmem [resolvable:$true] %s45
      %51 = dma.hbm_to_vmem [thread:$0]  %s3, 1024, %s46, [#allocation5], 64, 64, 4
    $region17: #{inverse_dynamics.2} parent=1 // pred_fallthru
      _
    // Predicated region
    $region18: #{inverse_dynamics.2} parent=1 // pred_check
      _
    $region19: #{inverse_dynamics.2} parent=1 // pred_check_branch
      %53 = sbr.rel (0) target = $region21
    $region20: #{inverse_dynamics.2} parent=1 // pred_region
      %s55 = ssub.s32 16, 16
      %56 = vsyncadd [#allocation8], %s55
      %s58 = sshll.u32 [#allocation7], 4
      %s59 = int_to_ptr.vmem [resolvable:$true] %s58
      %61 = dma.hbm_to_vmem [thread:$0]  %s4, 16, %s59, [#allocation8]
    $region21: #{inverse_dynamics.2} parent=1 // pred_fallthru
      _
    // Predicated region
    $region22: #{inverse_dynamics.2} parent=1 // pred_check
      _
    $region23: #{inverse_dynamics.2} parent=1 // pred_check_branch
      %63 = sbr.rel (0) target = $region25
    $region24: #{inverse_dynamics.2} parent=1 // pred_region
      %s65 = ssub.s32 1024, 1024
      %66 = vsyncadd [#allocation8], %s65
      %s67 = sshll.u32 [#allocation9], 4
      %s68 = int_to_ptr.vmem [resolvable:$true] %s67
      %73 = dma.hbm_to_vmem [thread:$0]  %s5, 1024, %s68, [#allocation8], 64, 64, 4
    $region25: #{inverse_dynamics.2} parent=1 // pred_fallthru
      _
    // Predicated region
    $region26: #{inverse_dynamics.2} parent=1 // pred_check
      _
    $region27: #{inverse_dynamics.2} parent=1 // pred_check_branch
      %75 = sbr.rel (0) target = $region29
    $region28: #{inverse_dynamics.2} parent=1 // pred_region
      %s77 = ssub.s32 16, 16
      %78 = vsyncadd [#allocation11], %s77
      %s80 = sshll.u32 [#allocation10], 4
      %s81 = int_to_ptr.vmem [resolvable:$true] %s80
      %83 = dma.hbm_to_vmem [thread:$0]  %s6, 16, %s81, [#allocation11]
    $region29: #{inverse_dynamics.2} parent=1 // pred_fallthru
      _
    // Predicated region
    $region30: #{inverse_dynamics.2} parent=1 // pred_check
      _
    $region31: #{inverse_dynamics.2} parent=1 // pred_check_branch
      %85 = sbr.rel (0) target = $region33
    $region32: #{inverse_dynamics.2} parent=1 // pred_region
      %86 = dma.done [#allocation3], 512
    $region33: #{inverse_dynamics.2} parent=1 // pred_fallthru
      _
    // Predicated region
    $region34: #{inverse_dynamics.2} parent=1 // pred_check
      _
    $region35: #{inverse_dynamics.2} parent=1 // pred_check_branch
      %88 = sbr.rel (0) target = $region37
    $region36: #{inverse_dynamics.2} parent=1 // pred_region
      %89 = dma.done [#allocation5], 16
    $region37: #{inverse_dynamics.2} parent=1 // pred_fallthru
      _
    // Predicated region
    $region38: #{inverse_dynamics.2} parent=1 // pred_check
      _
    $region39: #{inverse_dynamics.2} parent=1 // pred_check_branch
      %91 = sbr.rel (0) target = $region41
    $region40: #{inverse_dynamics.2} parent=1 // pred_region
      %92 = dma.done [#allocation5], 1024
    $region41: #{inverse_dynamics.2} parent=1 // pred_fallthru
      _
    // Predicated region
    $region42: #{inverse_dynamics.2} parent=1 // pred_check
      _
    $region43: #{inverse_dynamics.2} parent=1 // pred_check_branch
      %94 = sbr.rel (0) target = $region45
    $region44: #{inverse_dynamics.2} parent=1 // pred_region
      %95 = dma.done [#allocation8], 16
    $region45: #{inverse_dynamics.2} parent=1 // pred_fallthru
      _
    // Predicated region
    $region46: #{inverse_dynamics.2} parent=1 // pred_check
      _
    $region47: #{inverse_dynamics.2} parent=1 // pred_check_branch
      %97 = sbr.rel (0) target = $region49
    $region48: #{inverse_dynamics.2} parent=1 // pred_region
      %98 = dma.done [#allocation8], 1024
    $region49: #{inverse_dynamics.2} parent=1 // pred_fallthru
      _
    // Predicated region
    $region50: #{inverse_dynamics.2} parent=1 // pred_check
      _
    $region51: #{inverse_dynamics.2} parent=1 // pred_check_branch
      %100 = sbr.rel (0) target = $region53
    $region52: #{inverse_dynamics.2} parent=1 // pred_region
      %101 = dma.done [#allocation11], 16
    $region53: #{inverse_dynamics.2} parent=1 // pred_fallthru
      _
    %v103 = vld [vmem:[%s0] sm:$0xf]
    %v104 = vld [vmem:[%s0 + $0x4] sm:$0xf]
    %v105 = vld [vmem:[#allocation2] sm:$0xf]
    %v106 = vld [vmem:[#allocation2 + $0x4] sm:$0xf]
    %v107 = vld [vmem:[#allocation2 + $0x8] sm:$0xf]
    %v108 = vld [vmem:[#allocation2 + $0xc] sm:$0xf]
    %v109 = vld [vmem:[#allocation2 + $0x10] sm:$0xf]
    %v110 = vld [vmem:[#allocation2 + $0x14] sm:$0xf]
    %v111 = vld [vmem:[#allocation2 + $0x18] sm:$0xf]
    %v112 = vld [vmem:[#allocation2 + $0x1c] sm:$0xf]
    %v113 = vld [vmem:[#allocation4] sm:$0x1]
    %v115 = vlaneseq
    %v116 = vshrl.u32 %v115, 7
    %v117 = vsub.s32 0, %v116
    %v118 = vrot.slane %v113, %v117
    %v122 = vunpack.c.l.b16 %v103
    %v123 = vunpack.c.l.b16 %v104
    %v124 = vpack.c.b16 %v123, %v122
    %v133 = vunpack.c.l.b16 %v105
    %v134 = vunpack.c.l.b16 %v106
    %v135 = vunpack.c.l.b16 %v107
    %v136 = vunpack.c.l.b16 %v108
    %v137 = vunpack.c.l.b16 %v109
    %v138 = vunpack.c.l.b16 %v110
    %v139 = vunpack.c.l.b16 %v111
    %v140 = vunpack.c.l.b16 %v112
    %v141 = vpack.c.b16 %v134, %v133
    %v142 = vpack.c.b16 %v136, %v135
    %v143 = vpack.c.b16 %v138, %v137
    %v144 = vpack.c.b16 %v140, %v139
    %vm149 = vcmask 523264
    %v151 = vsel %vm149, %v124, 0
    %153 = vmatprep.subr.bf16.mxu0 0
    %154 = vmatpush1.bf16.msra.mxu0 0
    %155 = vmatprep.subr.bf16.mxu0 0
    %156 = vmatpush1.bf16.msra.mxu0 0
    %157 = vmatprep.subr.bf16.mxu0 0
    %158 = vmatpush1.bf16.msra.mxu0 0
    %159 = vmatprep.subr.bf16.mxu0 0
    %160 = vmatpush1.bf16.msra.mxu0 0
    %161 = vmatprep.subr.bf16.mxu0 0
    %162 = vmatpush1.bf16.msra.mxu0 %v144
    %163 = vmatprep.subr.bf16.mxu0 0
    %164 = vmatpush1.bf16.msra.mxu0 %v143
    %165 = vmatprep.subr.bf16.mxu0 0
    %166 = vmatpush1.bf16.msra.mxu0 %v142
    %167 = vmatprep.subr.bf16.mxu0 0
    %168 = vmatpush1.bf16.msra.mxu0 %v141
    %169 = vmatprep.subr.bf16.mxu0 0
    %170 = vmatpush2.bf16.msra.mxu0 0
    %171 = vmatprep.subr.bf16.mxu0 0
    %172 = vmatpush2.bf16.msra.mxu0 0
    %173 = vmatprep.subr.bf16.mxu0 0
    %174 = vmatpush2.bf16.msra.mxu0 0
    %175 = vmatprep.subr.bf16.mxu0 0
    %176 = vmatpush2.bf16.msra.mxu0 0
    %177 = vmatprep.subr.bf16.mxu0 0
    %178 = vmatpush2.bf16.msra.mxu0 0
    %179 = vmatprep.subr.bf16.mxu0 0
    %180 = vmatpush2.bf16.msra.mxu0 0
    %181 = vmatprep.subr.bf16.mxu0 0
    %182 = vmatpush2.bf16.msra.mxu0 0
    %183 = vmatprep.subr.bf16.mxu0 0
    %184 = vmatpush2.bf16.msra.mxu0 0
    %185 = vmatprep.mubr.bf16.mxu0 0
    %186 = vmatmul.mubr.bf16.gmra.mxu0 %v151
    %v187 = vpop.f32.mrf.mxu0
    %v188 = vadd.f32 %v118, %v187
    %v189 = vpop.f32.mrf.mxu0
    %v190 = vpop.f32.mrf.mxu0
    %v191 = vadd.f32 %v118, %v190
    %v192 = vpop.f32.mrf.mxu0
    %193 = vdwg.mxu0
    %v194 = vmax.f32 %v188, 0.0
    %v195 = vmax.f32 %v191, 0.0
    %v196 = vpack.c.bf16 %v195, %v194
    %v197 = vld [vmem:[#allocation6] sm:$0xf]
    %v198 = vld [vmem:[#allocation6 + $0x4] sm:$0xf]
    %v199 = vld [vmem:[#allocation6 + $0x8] sm:$0xf]
    %v200 = vld [vmem:[#allocation6 + $0xc] sm:$0xf]
    %v201 = vld [vmem:[#allocation6 + $0x10] sm:$0xf]
    %v202 = vld [vmem:[#allocation6 + $0x14] sm:$0xf]
    %v203 = vld [vmem:[#allocation6 + $0x18] sm:$0xf]
    %v204 = vld [vmem:[#allocation6 + $0x1c] sm:$0xf]
    %v205 = vld [vmem:[#allocation6 + $0x20] sm:$0xf]
    %v206 = vld [vmem:[#allocation6 + $0x24] sm:$0xf]
    %v207 = vld [vmem:[#allocation6 + $0x28] sm:$0xf]
    %v208 = vld [vmem:[#allocation6 + $0x2c] sm:$0xf]
    %v209 = vld [vmem:[#allocation6 + $0x30] sm:$0xf]
    %v210 = vld [vmem:[#allocation6 + $0x34] sm:$0xf]
    %v211 = vld [vmem:[#allocation6 + $0x38] sm:$0xf]
    %v212 = vld [vmem:[#allocation6 + $0x3c] sm:$0xf]
    %v213 = vld [vmem:[#allocation7] sm:$0x1]
    %v215 = vlaneseq
    %v216 = vshrl.u32 %v215, 7
    %v217 = vsub.s32 0, %v216
    %v218 = vrot.slane %v213, %v217
    %v236 = vunpack.c.l.b16 %v197
    %v237 = vunpack.c.l.b16 %v198
    %v238 = vunpack.c.l.b16 %v199
    %v239 = vunpack.c.l.b16 %v200
    %v240 = vunpack.c.l.b16 %v201
    %v241 = vunpack.c.l.b16 %v202
    %v242 = vunpack.c.l.b16 %v203
    %v243 = vunpack.c.l.b16 %v204
    %v244 = vunpack.c.l.b16 %v205
    %v245 = vunpack.c.l.b16 %v206
    %v246 = vunpack.c.l.b16 %v207
    %v247 = vunpack.c.l.b16 %v208
    %v248 = vunpack.c.l.b16 %v209
    %v249 = vunpack.c.l.b16 %v210
    %v250 = vunpack.c.l.b16 %v211
    %v251 = vunpack.c.l.b16 %v212
    %v252 = vpack.c.b16 %v237, %v236
    %v253 = vpack.c.b16 %v239, %v238
    %v254 = vpack.c.b16 %v241, %v240
    %v255 = vpack.c.b16 %v243, %v242
    %v256 = vpack.c.b16 %v245, %v244
    %v257 = vpack.c.b16 %v247, %v246
    %v258 = vpack.c.b16 %v249, %v248
    %v259 = vpack.c.b16 %v251, %v250
    %268 = vmatprep.subr.bf16.mxu0 0
    %269 = vmatpush1.bf16.msra.mxu0 %v259
    %270 = vmatprep.subr.bf16.mxu0 0
    %271 = vmatpush1.bf16.msra.mxu0 %v258
    %272 = vmatprep.subr.bf16.mxu0 0
    %273 = vmatpush1.bf16.msra.mxu0 %v257
    %274 = vmatprep.subr.bf16.mxu0 0
    %275 = vmatpush1.bf16.msra.mxu0 %v256
    %276 = vmatprep.subr.bf16.mxu0 0
    %277 = vmatpush1.bf16.msra.mxu0 %v255
    %278 = vmatprep.subr.bf16.mxu0 0
    %279 = vmatpush1.bf16.msra.mxu0 %v254
    %280 = vmatprep.subr.bf16.mxu0 0
    %281 = vmatpush1.bf16.msra.mxu0 %v253
    %282 = vmatprep.subr.bf16.mxu0 0
    %283 = vmatpush1.bf16.msra.mxu0 %v252
    %284 = vmatprep.subr.bf16.mxu0 0
    %285 = vmatpush2.bf16.msra.mxu0 0
    %286 = vmatprep.subr.bf16.mxu0 0
    %287 = vmatpush2.bf16.msra.mxu0 0
    %288 = vmatprep.subr.bf16.mxu0 0
    %289 = vmatpush2.bf16.msra.mxu0 0
    %290 = vmatprep.subr.bf16.mxu0 0
    %291 = vmatpush2.bf16.msra.mxu0 0
    %292 = vmatprep.subr.bf16.mxu0 0
    %293 = vmatpush2.bf16.msra.mxu0 0
    %294 = vmatprep.subr.bf16.mxu0 0
    %295 = vmatpush2.bf16.msra.mxu0 0
    %296 = vmatprep.subr.bf16.mxu0 0
    %297 = vmatpush2.bf16.msra.mxu0 0
    %298 = vmatprep.subr.bf16.mxu0 0
    %299 = vmatpush2.bf16.msra.mxu0 0
    %300 = vmatprep.mubr.bf16.mxu0 0
    %301 = vmatmul.mubr.bf16.gmra.mxu0 %v196
    %v302 = vpop.f32.mrf.mxu0
    %v303 = vadd.f32 %v218, %v302
    %v304 = vpop.f32.mrf.mxu0
    %v305 = vpop.f32.mrf.mxu0
    %v306 = vadd.f32 %v218, %v305
    %v307 = vpop.f32.mrf.mxu0
    %308 = vdwg.mxu0
    %v309 = vmax.f32 %v303, 0.0
    %v310 = vmax.f32 %v306, 0.0
    %v311 = vpack.c.bf16 %v310, %v309
    %v312 = vld [vmem:[#allocation9] sm:$0xf]
    %v313 = vld [vmem:[#allocation9 + $0x4] sm:$0xf]
    %v314 = vld [vmem:[#allocation9 + $0x8] sm:$0xf]
    %v315 = vld [vmem:[#allocation9 + $0xc] sm:$0xf]
    %v316 = vld [vmem:[#allocation9 + $0x10] sm:$0xf]
    %v317 = vld [vmem:[#allocation9 + $0x14] sm:$0xf]
    %v318 = vld [vmem:[#allocation9 + $0x18] sm:$0xf]
    %v319 = vld [vmem:[#allocation9 + $0x1c] sm:$0xf]
    %v320 = vld [vmem:[#allocation9 + $0x20] sm:$0xf]
    %v321 = vld [vmem:[#allocation9 + $0x24] sm:$0xf]
    %v322 = vld [vmem:[#allocation9 + $0x28] sm:$0xf]
    %v323 = vld [vmem:[#allocation9 + $0x2c] sm:$0xf]
    %v324 = vld [vmem:[#allocation9 + $0x30] sm:$0xf]
    %v325 = vld [vmem:[#allocation9 + $0x34] sm:$0xf]
    %v326 = vld [vmem:[#allocation9 + $0x38] sm:$0xf]
    %v327 = vld [vmem:[#allocation9 + $0x3c] sm:$0xf]
    %v328 = vld [vmem:[#allocation10] sm:$0x1]
    %v330 = vlaneseq
    %v331 = vshrl.u32 %v330, 7
    %v332 = vsub.s32 0, %v331
    %v333 = vrot.slane %v328, %v332
    %v351 = vunpack.c.l.b16 %v312
    %v352 = vunpack.c.l.b16 %v313
    %v353 = vunpack.c.l.b16 %v314
    %v354 = vunpack.c.l.b16 %v315
    %v355 = vunpack.c.l.b16 %v316
    %v356 = vunpack.c.l.b16 %v317
    %v357 = vunpack.c.l.b16 %v318
    %v358 = vunpack.c.l.b16 %v319
    %v359 = vunpack.c.l.b16 %v320
    %v360 = vunpack.c.l.b16 %v321
    %v361 = vunpack.c.l.b16 %v322
    %v362 = vunpack.c.l.b16 %v323
    %v363 = vunpack.c.l.b16 %v324
    %v364 = vunpack.c.l.b16 %v325
    %v365 = vunpack.c.l.b16 %v326
    %v366 = vunpack.c.l.b16 %v327
    %v367 = vpack.c.b16 %v352, %v351
    %v368 = vpack.c.b16 %v354, %v353
    %v369 = vpack.c.b16 %v356, %v355
    %v370 = vpack.c.b16 %v358, %v357
    %v371 = vpack.c.b16 %v360, %v359
    %v372 = vpack.c.b16 %v362, %v361
    %v373 = vpack.c.b16 %v364, %v363
    %v374 = vpack.c.b16 %v366, %v365
    %383 = vmatprep.subr.bf16.mxu0 0
    %384 = vmatpush1.bf16.msra.mxu0 %v374
    %385 = vmatprep.subr.bf16.mxu0 0
    %386 = vmatpush1.bf16.msra.mxu0 %v373
    %387 = vmatprep.subr.bf16.mxu0 0
    %388 = vmatpush1.bf16.msra.mxu0 %v372
    %389 = vmatprep.subr.bf16.mxu0 0
    %390 = vmatpush1.bf16.msra.mxu0 %v371
    %391 = vmatprep.subr.bf16.mxu0 0
    %392 = vmatpush1.bf16.msra.mxu0 %v370
    %393 = vmatprep.subr.bf16.mxu0 0
    %394 = vmatpush1.bf16.msra.mxu0 %v369
    %395 = vmatprep.subr.bf16.mxu0 0
    %396 = vmatpush1.bf16.msra.mxu0 %v368
    %397 = vmatprep.subr.bf16.mxu0 0
    %398 = vmatpush1.bf16.msra.mxu0 %v367
    %399 = vmatprep.subr.bf16.mxu0 0
    %400 = vmatpush2.bf16.msra.mxu0 0
    %401 = vmatprep.subr.bf16.mxu0 0
    %402 = vmatpush2.bf16.msra.mxu0 0
    %403 = vmatprep.subr.bf16.mxu0 0
    %404 = vmatpush2.bf16.msra.mxu0 0
    %405 = vmatprep.subr.bf16.mxu0 0
    %406 = vmatpush2.bf16.msra.mxu0 0
    %407 = vmatprep.subr.bf16.mxu0 0
    %408 = vmatpush2.bf16.msra.mxu0 0
    %409 = vmatprep.subr.bf16.mxu0 0
    %410 = vmatpush2.bf16.msra.mxu0 0
    %411 = vmatprep.subr.bf16.mxu0 0
    %412 = vmatpush2.bf16.msra.mxu0 0
    %413 = vmatprep.subr.bf16.mxu0 0
    %414 = vmatpush2.bf16.msra.mxu0 0
    %415 = vmatprep.mubr.bf16.mxu0 0
    %416 = vmatmul.mubr.bf16.gmra.mxu0 %v311
    %v417 = vpop.f32.mrf.mxu0
    %v418 = vadd.f32 %v333, %v417
    %v419 = vpop.f32.mrf.mxu0
    %v420 = vpop.f32.mrf.mxu0
    %v421 = vadd.f32 %v333, %v420
    %v422 = vpop.f32.mrf.mxu0
    %423 = vdwg.mxu0
    %v424 = vpack.c.bf16 %v421, %v418
    %v426 = vunpack.c.l.b16 %v424
    %v427 = vunpack.c.h.b16 %v424
    %v428 = vpack.c.b16 %v426, %v426
    %v429 = vpack.c.b16 %v427, %v427
    %432 = vst [vmem:[%s7] sm:$0xf] %v428
    %433 = vst [vmem:[%s7 + $0x4] sm:$0xf] %v429
    // Predicated region
    $region54: #{inverse_dynamics.2} parent=1 // pred_check
      _
    $region55: #{inverse_dynamics.2} parent=1 // pred_check_branch
      %435 = sbr.rel (0) target = $region57
    $region56: #{inverse_dynamics.2} parent=1 // pred_region
      _
    $region57: #{inverse_dynamics.2} parent=1 // pred_fallthru
      _
    // Predicated region
    $region58: #{inverse_dynamics.2} parent=1 // pred_check
      _
    $region59: #{inverse_dynamics.2} parent=1 // pred_check_branch
      %437 = sbr.rel (0) target = $region61
    $region60: #{inverse_dynamics.2} parent=1 // pred_region
      _
    $region61: #{inverse_dynamics.2} parent=1 // pred_fallthru
      _
    %438 = vsyncpa [#allocation3], 1
    %439 = vsyncpa [#allocation5], 1
    %440 = vsyncpa [#allocation8], 1
    %441 = vsyncpa [#allocation11], 1

</llo_original>
